<compile_context>
chip_gen: v7x
topology: tpu7x:2x2x1
jax: 0.10.0
libtpu: 0.0.40
codegen_flags: <defaults>
</compile_context>

<pallas_src>
import jax
import jax.numpy as jnp
from jax import lax
from jax.experimental import pallas as pl
from jax.experimental.pallas import tpu as pltpu

_INV_SQRT2 = 0.7071067811865476


def _ffn_kernel(x_ref, w1_ref, b1_ref, w2_ref, b2_ref, o_ref, acc_ref):
    # x_ref:  (tm, E)  bf16   -- resident across the H axis
    # w1_ref: (E, th)  bf16
    # b1_ref: (1, th)  f32
    # w2_ref: (th, E)  bf16
    # b2_ref: (1, E)   f32
    # o_ref:  (tm, E)  out dtype (resident across H axis)
    # acc_ref:(tm, E)  f32 scratch accumulator
    hstep = pl.program_id(1)

    @pl.when(hstep == 0)
    def _():
        acc_ref[...] = jnp.zeros_like(acc_ref)

    # First matmul: (tm, E) @ (E, th) -> (tm, th), f32 accumulation on MXU.
    h = jnp.dot(x_ref[...], w1_ref[...], preferred_element_type=jnp.float32)
    h = h + b1_ref[...]                       # bias only on current (tm, th) tile
    # Exact (erf) GELU, matching torch.nn.GELU() default.
    h = 0.5 * h * (1.0 + lax.erf(h * _INV_SQRT2))

    # Second matmul: accumulate (tm, th) @ (th, E) into the f32 scratch.
    acc_ref[...] += jnp.dot(h.astype(jnp.bfloat16), w2_ref[...],
                            preferred_element_type=jnp.float32)

    @pl.when(hstep == pl.num_programs(1) - 1)
    def _():
        o_ref[...] = (acc_ref[...] + b2_ref[...]).astype(o_ref.dtype)


def _round_up(a, b):
    return (a + b - 1) // b * b


def _pad2(a, rows, cols):
    return jnp.pad(a, ((0, rows - a.shape[0]), (0, cols - a.shape[1])))


def feed_forward_v1(x, w1, b1, w2, b2, *, tm=256, th=512):
    """x: (B, T, E). w1: (E, 4E), b1: (4E,), w2: (4E, E), b2: (E,)."""
    B, T, E = x.shape
    H = w1.shape[1]
    N = B * T

    # Lane-dense padding: E and H up to multiples of 128.
    E_pad = _round_up(E, 128)
    th = max(128, _round_up(min(th, _round_up(H, 128)), 128))
    H_pad = _round_up(_round_up(H, 128), th)
    tm = min(tm, _round_up(N, 8))
    N_pad = _round_up(N, tm)

    # bf16 operands for the MXU (f32 accumulation inside the kernel).
    x2d = _pad2(x.reshape(N, E).astype(jnp.bfloat16), N_pad, E_pad)
    w1p = _pad2(w1.astype(jnp.bfloat16), E_pad, H_pad)
    w2p = _pad2(w2.astype(jnp.bfloat16), H_pad, E_pad)
    b1p = _pad2(b1.reshape(1, H).astype(jnp.float32), 1, H_pad)
    b2p = _pad2(b2.reshape(1, E).astype(jnp.float32), 1, E_pad)

    grid = (N_pad // tm, H_pad // th)

    cost = pl.CostEstimate(
        flops=4 * N_pad * E_pad * H_pad,
        transcendentals=N_pad * H_pad,
        bytes_accessed=(x2d.size * 2 + w1p.size * 2 + w2p.size * 2
                        + b1p.size * 4 + b2p.size * 4 + N_pad * E_pad * 4),
    )

    out = pl.pallas_call(
        _ffn_kernel,
        out_shape=jax.ShapeDtypeStruct((N_pad, E_pad), x.dtype),
        grid_spec=pltpu.PrefetchScalarGridSpec(
            num_scalar_prefetch=0,
            grid=grid,
            in_specs=[
                pl.BlockSpec((tm, E_pad), lambda i, h: (i, 0)),    # x tile
                pl.BlockSpec((E_pad, th), lambda i, h: (0, h)),    # w1 block
                pl.BlockSpec((1, th),     lambda i, h: (0, h)),    # b1 block
                pl.BlockSpec((th, E_pad), lambda i, h: (h, 0)),    # w2 block
                pl.BlockSpec((1, E_pad),  lambda i, h: (0, 0)),    # b2
            ],
            out_specs=pl.BlockSpec((tm, E_pad), lambda i, h: (i, 0)),
            scratch_shapes=[pltpu.VMEM((tm, E_pad), jnp.float32)],
        ),
        compiler_params=pltpu.CompilerParams(
            dimension_semantics=("parallel", "arbitrary"),
            vmem_limit_bytes=48 * 1024 * 1024,   # headroom under v7x 64 MiB
        ),
        cost_estimate=cost,
    )(x2d, w1p, b1p, w2p, b2p)

    return out[:N, :E].reshape(B, T, E)


def _reference_f32(x, w1, b1, w2, b2):
    h = x @ w1 + b1
    h = 0.5 * h * (1.0 + lax.erf(h * _INV_SQRT2))
    return h @ w2 + b2


def _reference_bf16(x, w1, b1, w2, b2):
    # Matches the kernel's bf16-operand / f32-accumulation numerics.
    h = jnp.dot(x.astype(jnp.bfloat16), w1.astype(jnp.bfloat16),
                preferred_element_type=jnp.float32) + b1
    h = 0.5 * h * (1.0 + lax.erf(h * _INV_SQRT2))
    return jnp.dot(h.astype(jnp.bfloat16), w2.astype(jnp.bfloat16),
                   preferred_element_type=jnp.float32) + b2


if __name__ == "__main__":
    cfg = {"embedding_dimension": 128}
    E = cfg["embedding_dimension"]
    H = 4 * E
    B, T = 2, 64

    key = jax.random.PRNGKey(0)
    kx, k1, k2, k3, k4 = jax.random.split(key, 5)

    # PyTorch Linear weights (W1: (4E,E), W2: (E,4E)) stored transposed for
    # x @ W-style matmuls.
    x = jax.random.normal(kx, (B, T, E), dtype=jnp.float32)
    w1 = jax.random.normal(k1, (E, H), dtype=jnp.float32) * (1.0 / jnp.sqrt(E))
    b1 = jax.random.normal(k2, (H,), dtype=jnp.float32) * 0.01
    w2 = jax.random.normal(k3, (H, E), dtype=jnp.float32) * (1.0 / jnp.sqrt(H))
    b2 = jax.random.normal(k4, (E,), dtype=jnp.float32) * 0.01

    # th=128 exercises the multi-step H reduction / accumulator path.
    y = feed_forward_v1(x, w1, b1, w2, b2, th=128)
    y = jax.block_until_ready(y)
    assert y.shape == (B, T, E)

    # Tight check against a bf16-operand reference (same numerics as kernel).
    y_bf16 = _reference_bf16(x.reshape(B * T, E), w1, b1, w2, b2).reshape(B, T, E)
    assert jnp.allclose(y, y_bf16, atol=1e-3, rtol=1e-3), "mismatch vs bf16 reference"

    # Loose check against the pure-f32 reference (bf16 operand quantization).
    y_f32 = _reference_f32(x.reshape(B * T, E), w1, b1, w2, b2).reshape(B, T, E)
    assert jnp.allclose(y, y_f32, atol=5e-2, rtol=5e-2), "mismatch vs f32 reference"

    print("KERNEL_OK")
</pallas_src>

<mosaic_0001>
module attributes {stable_mosaic.version = 11 : i64} {
  func.func @_ffn_kernel(%arg0: i32, %arg1: i32, %arg2: memref<128x128xbf16, #tpu.memory_space<vmem>>, %arg3: memref<128x128xbf16, #tpu.memory_space<vmem>>, %arg4: memref<1x128xf32, #tpu.memory_space<vmem>>, %arg5: memref<128x128xbf16, #tpu.memory_space<vmem>>, %arg6: memref<1x128xf32, #tpu.memory_space<vmem>>, %arg7: memref<128x128xf32, #tpu.memory_space<vmem>>, %arg8: memref<128x128xf32, #tpu.memory_space<vmem>>) attributes {dimension_semantics = [#tpu.dimension_semantics<parallel>, #tpu.dimension_semantics<arbitrary>], iteration_bounds = array<i64: 1, 4>, scalar_prefetch = 0 : i64, scratch_operands = 1 : i64, tpu.core_type = #tpu.core_type<tc>, window_params = [{transform_indices = @transform_0, window_bounds = array<i64: 128, 128>}, {transform_indices = @transform_1, window_bounds = array<i64: 128, 128>}, {transform_indices = @transform_2, window_bounds = array<i64: 1, 128>}, {transform_indices = @transform_3, window_bounds = array<i64: 128, 128>}, {pipeline_mode = #tpu.pipeline_mode<synchronous>, transform_indices = @transform_4, window_bounds = array<i64: 1, 128>}, {transform_indices = @transform_5, window_bounds = array<i64: 128, 128>}]} {
    %c0_i32 = arith.constant 0 : i32
    %0 = arith.cmpi eq, %arg1, %c0_i32 : i32
    %1 = arith.extui %0 : i1 to i32
    %c0_i32_0 = arith.constant 0 : i32
    %2 = arith.cmpi ne, %1, %c0_i32_0 : i32
    scf.if %2 {
      %cst_17 = arith.constant 0.000000e+00 : f32
      %26 = vector.broadcast %cst_17 : f32 to vector<128x128xf32>
      %c0_18 = arith.constant 0 : index
      %c0_19 = arith.constant 0 : index
      %27 = vector.load %arg8[%c0_18, %c0_19] : memref<128x128xf32, #tpu.memory_space<vmem>>, vector<128x128xf32>
      tpu.vector_store %arg8[%c0_18, %c0_19], %26 {strides = array<i32>} : memref<128x128xf32, #tpu.memory_space<vmem>>, vector<128x128xf32>,
    } else {
    }
    %c0 = arith.constant 0 : index
    %c0_1 = arith.constant 0 : index
    %3 = vector.load %arg2[%c0, %c0_1] : memref<128x128xbf16, #tpu.memory_space<vmem>>, vector<128x128xbf16>
    %c0_2 = arith.constant 0 : index
    %c0_3 = arith.constant 0 : index
    %4 = vector.load %arg3[%c0_2, %c0_3] : memref<128x128xbf16, #tpu.memory_space<vmem>>, vector<128x128xbf16>
    %cst = arith.constant dense<0.000000e+00> : vector<128x128xf32>
    %5 = tpu.matmul %3, %4, %cst {dimension_numbers = #tpu.dot_dimension_numbers<[1], [0], [0], [1], [0, 0, 1, 1], [], []>} : vector<128x128xbf16>, vector<128x128xbf16>, vector<128x128xf32> -> vector<128x128xf32>
    %c0_4 = arith.constant 0 : index
    %c0_5 = arith.constant 0 : index
    %6 = vector.load %arg4[%c0_4, %c0_5] : memref<1x128xf32, #tpu.memory_space<vmem>>, vector<1x128xf32>
    %7 = vector.broadcast %6 : vector<1x128xf32> to vector<128x128xf32>
    %8 = arith.addf %5, %7 : vector<128x128xf32>
    %cst_6 = arith.constant 5.000000e-01 : f32
    %9 = vector.broadcast %cst_6 : f32 to vector<128x128xf32>
    %10 = arith.mulf %9, %8 : vector<128x128xf32>
    %cst_7 = arith.constant 0.707106769 : f32
    %11 = vector.broadcast %cst_7 : f32 to vector<128x128xf32>
    %12 = arith.mulf %8, %11 : vector<128x128xf32>
    %13 = math.erf %12 : vector<128x128xf32>
    %cst_8 = arith.constant 1.000000e+00 : f32
    %14 = vector.broadcast %cst_8 : f32 to vector<128x128xf32>
    %15 = arith.addf %14, %13 : vector<128x128xf32>
    %16 = arith.mulf %10, %15 : vector<128x128xf32>
    %c0_9 = arith.constant 0 : index
    %c0_10 = arith.constant 0 : index
    %17 = vector.load %arg8[%c0_9, %c0_10] : memref<128x128xf32, #tpu.memory_space<vmem>>, vector<128x128xf32>
    %18 = arith.truncf %16 : vector<128x128xf32> to vector<128x128xbf16>
    %c0_11 = arith.constant 0 : index
    %c0_12 = arith.constant 0 : index
    %19 = vector.load %arg5[%c0_11, %c0_12] : memref<128x128xbf16, #tpu.memory_space<vmem>>, vector<128x128xbf16>
    %cst_13 = arith.constant dense<0.000000e+00> : vector<128x128xf32>
    %20 = tpu.matmul %18, %19, %cst_13 {dimension_numbers = #tpu.dot_dimension_numbers<[1], [0], [0], [1], [0, 0, 1, 1], [], []>} : vector<128x128xbf16>, vector<128x128xbf16>, vector<128x128xf32> -> vector<128x128xf32>
    %21 = arith.addf %17, %20 : vector<128x128xf32>
    %c0_14 = arith.constant 0 : index
    %c0_15 = arith.constant 0 : index
    %22 = vector.load %arg8[%c0_14, %c0_15] : memref<128x128xf32, #tpu.memory_space<vmem>>, vector<128x128xf32>
    tpu.vector_store %arg8[%c0_14, %c0_15], %21 {strides = array<i32>} : memref<128x128xf32, #tpu.memory_space<vmem>>, vector<128x128xf32>,
    %c3_i32 = arith.constant 3 : i32
    %23 = arith.cmpi eq, %arg1, %c3_i32 : i32
    %24 = arith.extui %23 : i1 to i32
    %c0_i32_16 = arith.constant 0 : i32
    %25 = arith.cmpi ne, %24, %c0_i32_16 : i32
    scf.if %25 {
      %c0_17 = arith.constant 0 : index
      %c0_18 = arith.constant 0 : index
      %26 = vector.load %arg8[%c0_17, %c0_18] : memref<128x128xf32, #tpu.memory_space<vmem>>, vector<128x128xf32>
      %c0_19 = arith.constant 0 : index
      %c0_20 = arith.constant 0 : index
      %27 = vector.load %arg6[%c0_19, %c0_20] : memref<1x128xf32, #tpu.memory_space<vmem>>, vector<1x128xf32>
      %28 = vector.broadcast %27 : vector<1x128xf32> to vector<128x128xf32>
      %29 = arith.addf %26, %28 : vector<128x128xf32>
      %c0_21 = arith.constant 0 : index
      %c0_22 = arith.constant 0 : index
      %30 = vector.load %arg7[%c0_21, %c0_22] : memref<128x128xf32, #tpu.memory_space<vmem>>, vector<128x128xf32>
      tpu.vector_store %arg7[%c0_21, %c0_22], %29 {strides = array<i32>} : memref<128x128xf32, #tpu.memory_space<vmem>>, vector<128x128xf32>,
    } else {
    }
    return
  }
  func.func @transform_0(%arg0: i32, %arg1: i32) -> (i32, i32) {
    %c0_i32 = arith.constant 0 : i32
    %c0_i32_0 = arith.constant 0 : i32
    return %arg0, %c0_i32 : i32, i32
  }
  func.func @transform_1(%arg0: i32, %arg1: i32) -> (i32, i32) {
    %c0_i32 = arith.constant 0 : i32
    %c0_i32_0 = arith.constant 0 : i32
    return %c0_i32, %arg1 : i32, i32
  }
  func.func @transform_2(%arg0: i32, %arg1: i32) -> (i32, i32) {
    %c0_i32 = arith.constant 0 : i32
    %c0_i32_0 = arith.constant 0 : i32
    return %c0_i32, %arg1 : i32, i32
  }
  func.func @transform_3(%arg0: i32, %arg1: i32) -> (i32, i32) {
    %c0_i32 = arith.constant 0 : i32
    %c0_i32_0 = arith.constant 0 : i32
    return %arg1, %c0_i32 : i32, i32
  }
  func.func @transform_4(%arg0: i32, %arg1: i32) -> (i32, i32) {
    %c0_i32 = arith.constant 0 : i32
    %c0_i32_0 = arith.constant 0 : i32
    %c0_i32_1 = arith.constant 0 : i32
    return %c0_i32, %c0_i32_0 : i32, i32
  }
  func.func @transform_5(%arg0: i32, %arg1: i32) -> (i32, i32) {
    %c0_i32 = arith.constant 0 : i32
    %c0_i32_0 = arith.constant 0 : i32
    return %arg0, %c0_i32 : i32, i32
  }
}

</mosaic_0001>

<llo_original>
// kernel: tpu_custom_call.1
$region0: #{tpu_custom_call.1}
  #allocation0 [shape = 'u32[]', space=smem, size = 0x4, offset = 0x4, fixed_abs, tag = 'smem constant byte address 0x4 - core index']
  #allocation1 [shape = 'u32[144,128]{1,0:T(1,128)}', space=vmem, size = 0x12000, scoped, tag = 'internal scratch']
  #allocation2 [shape = 'f32[128,128]{1,0:T(8,128)}', space=vmem, size = 0x10000, scoped, tag = 'scratch operand']
  %s0 = inlined_call_operand.hbm [shape: bf16[128,128], index: 0, kind: input, shape index: {}]
  %s1 = inlined_call_operand.hbm [shape: bf16[128,512], index: 1, kind: input, shape index: {}]
  %s2 = inlined_call_operand.vmem [shape: f32[1,512], index: 2, kind: input, shape index: {}]
  %s3 = inlined_call_operand.hbm [shape: bf16[512,128], index: 3, kind: input, shape index: {}]
  %s4 = inlined_call_operand.vmem [shape: f32[1,128], index: 4, kind: input, shape index: {}]
  %s5 = inlined_call_operand.hbm [shape: f32[128,128], index: 5, kind: output, shape index: {}]
  %s6 = sld [smem:[#allocation0]]
  $region73: #{tpu_custom_call.1} parent=0
    _
  %s8 = ssub.s32 1, %s6
  %s9 = scalar_select 0, %s8, %s6
  $region1: #{tpu_custom_call.1} parent=0
    #allocation3 [shape = 'u8[32768]{0}', space=vmem, size = 0x8000, scoped, tag = 'input window, operand 0, single buffered']
    #allocation4 [shape = 's32[2]{0}', space=sflag, size = 0x8, scoped, tag = 'scoped memory for tpu_custom_call.1']
    #allocation5 [shape = 's32[2]{0}', space=sflag, size = 0x8, scoped, tag = 'scoped memory for tpu_custom_call.1']
    #allocation6 [shape = 'u8[65536]{0}', space=vmem, size = 0x10000, scoped, tag = 'input window, operand 1']
    #allocation7 [shape = 's32[2]{0}', space=sflag, size = 0x8, scoped, tag = 'scoped memory for tpu_custom_call.1']
    #allocation8 [shape = 'u8[65536]{0}', space=vmem, size = 0x10000, scoped, tag = 'input window, operand 3']
    #allocation9 [shape = 'u8[65536]{0}', space=vmem, size = 0x10000, scoped, tag = 'output window, operand 0, single buffered']
    %10 = vsyncpa [#allocation4], 0
    %11 = vsyncpa [#allocation7], 0
    %s12 = scalar_lea.sflag [#allocation7], 1
    %13 = vsyncpa %s12, 0
    %14 = vsyncpa [#allocation5], 0
    loop: start=0, step=1, limit=6
    $region2: #{tpu_custom_call.1} parent=1 // loop_pre_header
      _
    $region3: #{tpu_custom_call.1} parent=1 // loop_header
      %s16 = sphi 0, %s20
      %p17 = scmp.ge.s32.totalorder %s16, 6
      %s23 = sphi 0, %s35
      %s24 = sphi 0, %s31
      %s25 = sphi 0, %s23
      %s26 = sphi 0, %s24
      %s27 = sphi 0, %s25
      %s28 = sphi 0, %s26
      %s38 = sphi 0, %s40
      %s41 = sphi 0, %s38
      %s42 = sphi 0, %s41
      %s58 = sphi 0, %s42
      %s64 = sphi 0, %s66
      %s67 = sphi 0, %s64
      %s68 = sphi 0, %s67
      %s84 = sphi 0, %s68
      %s90 = sphi 0, %s92
      %s93 = sphi 0, %s90
      %s94 = sphi 0, %s93
      %s110 = sphi 0, %s94
      %s116 = sphi 0, %s118
      %s119 = sphi 0, %s116
      %s120 = sphi 0, %s119
      %s136 = sphi 0, %s120
      %s140 = sphi 0, %s140
      %s142 = sphi 0, %s140
      %s143 = sphi 0, %s142
      %s157 = sphi 0, %s143
      %s163 = sphi 0, %s165
      %s166 = sphi 0, %s163
      %s167 = sphi 0, %s166
      %s183 = sphi 0, %s167
    $region4: #{tpu_custom_call.1} parent=1 // loop_header_branch
      %19 = sbr.rel (%p17) target = $region8
    $region5: #{tpu_custom_call.1} parent=1 // loop_body
      %s21 = ssub.s32 %s16, 1
      %s22 = ssub.s32 %s16, 2
      %s29 = sadd.s32 1, %s24
      %p30 = scmp.ge.s32.totalorder %s29, 4
      %s31 = scalar_select %p30, 0, %s29
      %s32 = sadd.s32 1, %s23
      %s33 = scalar_select %p30, %s32, %s23
      %p34 = scmp.ge.s32.totalorder %s33, 1
      %s35 = scalar_select %p34, 0, %s33
      %s36 = ssub.s32 %s23, %s35
      %p37 = scmp.eq.s32.totalorder %s36, 0
      %s39 = sadd.s32 %s38, 1
      %s40 = scalar_select %p37, %s38, %s39
      %p43 = pneg %p37
      %p44 = scmp.eq.s32.totalorder %s16, 3
      %p45 = por %p43, %p44
      %p46 = scmp.ne.s32.totalorder %s38, %s41
      %p47 = scmp.eq.s32.totalorder %s16, 0
      %p48 = por %p46, %p47
      %p49 = scmp.ne.s32.totalorder %s38, %s41
      %p50 = scmp.eq.s32.totalorder %s21, 3
      %p51 = por %p49, %p50
      %p52 = scmp.ne.s32.totalorder %s41, %s42
      %p53 = scmp.eq.s32.totalorder %s21, 0
      %p54 = por %p52, %p53
      %p55 = scmp.ne.s32.totalorder %s41, %s42
      %p56 = scmp.eq.s32.totalorder %s22, 3
      %p57 = por %p55, %p56
      %p59 = scmp.ne.s32.totalorder %s42, %s58
      %p60 = scmp.eq.s32.totalorder %s22, 0
      %p61 = por %p59, %p60
      %s62 = ssub.s32 %s24, %s31
      %p63 = scmp.eq.s32.totalorder %s62, 0
      %s65 = sadd.s32 %s64, 1
      %s66 = scalar_select %p63, %s64, %s65
      %p69 = pneg %p63
      %p70 = scmp.eq.s32.totalorder %s16, 3
      %p71 = por %p69, %p70
      %p72 = scmp.ne.s32.totalorder %s64, %s67
      %p73 = scmp.eq.s32.totalorder %s16, 0
      %p74 = por %p72, %p73
      %p75 = scmp.ne.s32.totalorder %s64, %s67
      %p76 = scmp.eq.s32.totalorder %s21, 3
      %p77 = por %p75, %p76
      %p78 = scmp.ne.s32.totalorder %s67, %s68
      %p79 = scmp.eq.s32.totalorder %s21, 0
      %p80 = por %p78, %p79
      %p81 = scmp.ne.s32.totalorder %s67, %s68
      %p82 = scmp.eq.s32.totalorder %s22, 3
      %p83 = por %p81, %p82
      %p85 = scmp.ne.s32.totalorder %s68, %s84
      %p86 = scmp.eq.s32.totalorder %s22, 0
      %p87 = por %p85, %p86
      %s88 = ssub.s32 %s24, %s31
      %p89 = scmp.eq.s32.totalorder %s88, 0
      %s91 = sadd.s32 %s90, 1
      %s92 = scalar_select %p89, %s90, %s91
      %p95 = pneg %p89
      %p96 = scmp.eq.s32.totalorder %s16, 3
      %p97 = por %p95, %p96
      %p98 = scmp.ne.s32.totalorder %s90, %s93
      %p99 = scmp.eq.s32.totalorder %s16, 0
      %p100 = por %p98, %p99
      %p101 = scmp.ne.s32.totalorder %s90, %s93
      %p102 = scmp.eq.s32.totalorder %s21, 3
      %p103 = por %p101, %p102
      %p104 = scmp.ne.s32.totalorder %s93, %s94
      %p105 = scmp.eq.s32.totalorder %s21, 0
      %p106 = por %p104, %p105
      %p107 = scmp.ne.s32.totalorder %s93, %s94
      %p108 = scmp.eq.s32.totalorder %s22, 3
      %p109 = por %p107, %p108
      %p111 = scmp.ne.s32.totalorder %s94, %s110
      %p112 = scmp.eq.s32.totalorder %s22, 0
      %p113 = por %p111, %p112
      %s114 = ssub.s32 %s24, %s31
      %p115 = scmp.eq.s32.totalorder %s114, 0
      %s117 = sadd.s32 %s116, 1
      %s118 = scalar_select %p115, %s116, %s117
      %p121 = pneg %p115
      %p122 = scmp.eq.s32.totalorder %s16, 3
      %p123 = por %p121, %p122
      %p124 = scmp.ne.s32.totalorder %s116, %s119
      %p125 = scmp.eq.s32.totalorder %s16, 0
      %p126 = por %p124, %p125
      %p127 = scmp.ne.s32.totalorder %s116, %s119
      %p128 = scmp.eq.s32.totalorder %s21, 3
      %p129 = por %p127, %p128
      %p130 = scmp.ne.s32.totalorder %s119, %s120
      %p131 = scmp.eq.s32.totalorder %s21, 0
      %p132 = por %p130, %p131
      %p133 = scmp.ne.s32.totalorder %s119, %s120
      %p134 = scmp.eq.s32.totalorder %s22, 3
      %p135 = por %p133, %p134
      %p137 = scmp.ne.s32.totalorder %s120, %s136
      %p138 = scmp.eq.s32.totalorder %s22, 0
      %p139 = por %p137, %p138
      %s141 = sadd.s32 %s140, 1
      %p144 = scmp.eq.s32.totalorder %s16, 3
      %p145 = scmp.ne.s32.totalorder %s140, %s142
      %p146 = scmp.eq.s32.totalorder %s16, 0
      %p147 = por %p145, %p146
      %p148 = scmp.ne.s32.totalorder %s140, %s142
      %p149 = scmp.eq.s32.totalorder %s21, 3
      %p150 = por %p148, %p149
      %p151 = scmp.ne.s32.totalorder %s142, %s143
      %p152 = scmp.eq.s32.totalorder %s21, 0
      %p153 = por %p151, %p152
      %p154 = scmp.ne.s32.totalorder %s142, %s143
      %p155 = scmp.eq.s32.totalorder %s22, 3
      %p156 = por %p154, %p155
      %p158 = scmp.ne.s32.totalorder %s143, %s157
      %p159 = scmp.eq.s32.totalorder %s22, 0
      %p160 = por %p158, %p159
      %s161 = ssub.s32 %s23, %s35
      %p162 = scmp.eq.s32.totalorder %s161, 0
      %s164 = sadd.s32 %s163, 1
      %s165 = scalar_select %p162, %s163, %s164
      %p168 = pneg %p162
      %p169 = scmp.eq.s32.totalorder %s16, 3
      %p170 = por %p168, %p169
      %p171 = scmp.ne.s32.totalorder %s163, %s166
      %p172 = scmp.eq.s32.totalorder %s16, 0
      %p173 = por %p171, %p172
      %p174 = scmp.ne.s32.totalorder %s163, %s166
      %p175 = scmp.eq.s32.totalorder %s21, 3
      %p176 = por %p174, %p175
      %p177 = scmp.ne.s32.totalorder %s166, %s167
      %p178 = scmp.eq.s32.totalorder %s21, 0
      %p179 = por %p177, %p178
      %p180 = scmp.ne.s32.totalorder %s166, %s167
      %p181 = scmp.eq.s32.totalorder %s22, 3
      %p182 = por %p180, %p181
      %p184 = scmp.ne.s32.totalorder %s167, %s183
      %p185 = scmp.eq.s32.totalorder %s22, 0
      %p186 = por %p184, %p185
      %p187 = scmp.le.s32.totalorder 1, %s16
      %p188 = scmp.lt.s32.totalorder %s16, 5
      %p189 = pnand %p187, %p188
      %p190 = pneg %p189
      // Predicated region
      $region9: #{tpu_custom_call.1} parent=5 // pred_check
        _
      $region10: #{tpu_custom_call.1} parent=5 // pred_check_branch
        %192 = sbr.rel (%p189) target = $region12
      $region11: #{tpu_custom_call.1} parent=5 // pred_region
        %s193 = ssub.s32 %s16, 1
        // Predicated region
        $region13: #{tpu_custom_call.1} parent=11 // pred_check
          %p194 = pneg %p54
        $region14: #{tpu_custom_call.1} parent=11 // pred_check_branch
          %196 = sbr.rel (%p194) target = $region16
        $region15: #{tpu_custom_call.1} parent=11 // pred_region
          %s197 = smul.u32 16, %s25
          %s199 = ssub.s32 1024, 1024
          %200 = vsyncadd [#allocation4], %s199
          %s201 = smul.addr %s197, 64
          %s202 = scalar_lea.hbm %s0, %s201
          %s203 = sshll.u32 [#allocation3], 4
          %s204 = int_to_ptr.vmem [resolvable:$true] %s203
          %209 = dma.hbm_to_vmem [thread:$0]  %s202, 1024, %s204, [#allocation4], 64, 64, 4
        $region16: #{tpu_custom_call.1} parent=11 // pred_fallthru
          _
        // Predicated region
        $region17: #{tpu_custom_call.1} parent=11 // pred_check
          %p210 = pneg %p153
        $region18: #{tpu_custom_call.1} parent=11 // pred_check_branch
          %212 = sbr.rel (%p210) target = $region20
        $region19: #{tpu_custom_call.1} parent=11 // pred_region
          _
        $region20: #{tpu_custom_call.1} parent=11 // pred_fallthru
          _
      $region12: #{tpu_custom_call.1} parent=5 // pred_fallthru
        _
      %p213 = scmp.lt.s32.totalorder %s16, 4
      // Predicated region
      $region21: #{tpu_custom_call.1} parent=5 // pred_check
        %p214 = pneg %p213
      $region22: #{tpu_custom_call.1} parent=5 // pred_check_branch
        %216 = sbr.rel (%p214) target = $region24
      $region23: #{tpu_custom_call.1} parent=5 // pred_region
        // Predicated region
        $region25: #{tpu_custom_call.1} parent=23 // pred_check
          %p217 = pneg %p74
        $region26: #{tpu_custom_call.1} parent=23 // pred_check_branch
          %219 = sbr.rel (%p217) target = $region28
        $region27: #{tpu_custom_call.1} parent=23 // pred_region
          %s220 = sand.u32 %s16, 1
          %s221 = scalar_lea.sflag [#allocation7], %s220
          %s222 = sand.u32 %s64, 1
          %s223 = smul.addr %s222, 64
          %s224 = scalar_lea.vmem [#allocation6], %s223
          %s226 = ssub.s32 1024, 1024
          %227 = vsyncadd %s221, %s226
          %s228 = smul.addr %s24, 64
          %s229 = scalar_lea.hbm %s1, %s228
          %s230 = sshll.u32 %s224, 4
          %s231 = int_to_ptr.vmem [resolvable:$true] %s230
          %236 = dma.hbm_to_vmem [thread:$0]  %s229, 1024, %s231, %s221, 256, 64, 4
        $region28: #{tpu_custom_call.1} parent=23 // pred_fallthru
          _
        // Predicated region
        $region29: #{tpu_custom_call.1} parent=23 // pred_check
          %p237 = pneg %p100
        $region30: #{tpu_custom_call.1} parent=23 // pred_check_branch
          %239 = sbr.rel (%p237) target = $region32
        $region31: #{tpu_custom_call.1} parent=23 // pred_region
          %p240 = scmp.lt.s32.totalorder %s24, 3
          %s241 = scalar_select %p240, %s24, 3
          %s242 = scalar_lea.vmem %s2, %s241
        $region32: #{tpu_custom_call.1} parent=23 // pred_fallthru
          _
        // Predicated region
        $region33: #{tpu_custom_call.1} parent=23 // pred_check
          %p243 = pneg %p126
        $region34: #{tpu_custom_call.1} parent=23 // pred_check_branch
          %245 = sbr.rel (%p243) target = $region36
        $region35: #{tpu_custom_call.1} parent=23 // pred_region
          %s246 = sand.u32 %s16, 1
          %s247 = scalar_lea.sflag [#allocation7], %s246
          %s248 = sand.u32 %s116, 1
          %s249 = smul.addr %s248, 64
          %s250 = scalar_lea.vmem [#allocation8], %s249
          %s251 = smul.u32 16, %s24
          %s253 = ssub.s32 1024, 1024
          %254 = vsyncadd %s247, %s253
          %s255 = smul.addr %s251, 64
          %s256 = scalar_lea.hbm %s3, %s255
          %s257 = sshll.u32 %s250, 4
          %s258 = int_to_ptr.vmem [resolvable:$true] %s257
          %263 = dma.hbm_to_vmem [thread:$0]  %s256, 1024, %s258, %s247, 64, 64, 4
        $region36: #{tpu_custom_call.1} parent=23 // pred_fallthru
          _
      $region24: #{tpu_custom_call.1} parent=5 // pred_fallthru
        _
      %p264 = scmp.le.s32.totalorder 1, %s16
      %p265 = scmp.lt.s32.totalorder %s16, 5
      %p266 = pnand %p264, %p265
      %p267 = pneg %p266
      // Predicated region
      $region37: #{tpu_custom_call.1} parent=5 // pred_check
        _
      $region38: #{tpu_custom_call.1} parent=5 // pred_check_branch
        %269 = sbr.rel (%p266) target = $region40
      $region39: #{tpu_custom_call.1} parent=5 // pred_region
        %s270 = ssub.s32 %s16, 1
        // Predicated region
        $region41: #{tpu_custom_call.1} parent=39 // pred_check
          %p271 = pneg %p54
        $region42: #{tpu_custom_call.1} parent=39 // pred_check_branch
          %273 = sbr.rel (%p271) target = $region44
        $region43: #{tpu_custom_call.1} parent=39 // pred_region
          %274 = dma.done [#allocation4], 1024
        $region44: #{tpu_custom_call.1} parent=39 // pred_fallthru
          _
        %s275 = sand.u32 %s21, 1
        %s276 = scalar_lea.sflag [#allocation7], %s275
        %s277 = sand.u32 %s67, 1
        %s278 = smul.addr %s277, 64
        %s279 = scalar_lea.vmem [#allocation6], %s278
        // Predicated region
        $region45: #{tpu_custom_call.1} parent=39 // pred_check
          %p280 = pneg %p80
        $region46: #{tpu_custom_call.1} parent=39 // pred_check_branch
          %282 = sbr.rel (%p280) target = $region48
        $region47: #{tpu_custom_call.1} parent=39 // pred_region
          %283 = dma.done %s276, 1024
        $region48: #{tpu_custom_call.1} parent=39 // pred_fallthru
          _
        %s284 = sand.u32 %s21, 1
        %s285 = scalar_lea.sflag [#allocation7], %s284
        %s286 = sand.u32 %s119, 1
        %s287 = smul.addr %s286, 64
        %s288 = scalar_lea.vmem [#allocation8], %s287
        // Predicated region
        $region49: #{tpu_custom_call.1} parent=39 // pred_check
          %p289 = pneg %p132
        $region50: #{tpu_custom_call.1} parent=39 // pred_check_branch
          %291 = sbr.rel (%p289) target = $region52
        $region51: #{tpu_custom_call.1} parent=39 // pred_region
          %292 = dma.done %s285, 1024
        $region52: #{tpu_custom_call.1} parent=39 // pred_fallthru
          _
        %p293 = pneg %p54
        %p294 = pneg %p51
        %s295 = sand.u32 %s21, 1
        %s296 = scalar_lea.sflag [#allocation7], %s295
        %s297 = sand.u32 %s67, 1
        %s298 = smul.addr %s297, 64
        %s299 = scalar_lea.vmem [#allocation6], %s298
        %p300 = pneg %p80
        %p301 = pneg %p77
        %p302 = scmp.lt.s32.totalorder %s26, 3
        %s303 = scalar_select %p302, %s26, 3
        %s304 = scalar_lea.vmem %s2, %s303
        %p305 = pneg %p106
        %p306 = pneg %p103
        %s307 = sand.u32 %s21, 1
        %s308 = scalar_lea.sflag [#allocation7], %s307
        %s309 = sand.u32 %s119, 1
        %s310 = smul.addr %s309, 64
        %s311 = scalar_lea.vmem [#allocation8], %s310
        %p312 = pneg %p132
        %p313 = pneg %p129
        %p314 = pneg %p153
        %p315 = pneg %p150
        %p316 = pneg %p179
        %p317 = pneg %p176
        %s318 = smul.u32 16, %s25
        %p319 = scmp.lt.s32.totalorder %s26, 3
        %s320 = scalar_select %p319, %s26, 3
        %s321 = scalar_lea.vmem %s2, %s320
        %s322 = smul.u32 16, %s26
        %s323 = smul.u32 16, %s25
        %p325 = scmp.eq.s32.totalorder %s26, 0
        // Predicated region
        $region53: #{tpu_custom_call.1} parent=39 // pred_check
          %p326 = pneg %p325
        $region54: #{tpu_custom_call.1} parent=39 // pred_check_branch
          %328 = sbr.rel (%p326) target = $region56
        $region55: #{tpu_custom_call.1} parent=39 // pred_region
          %329 = vst [vmem:[#allocation2] sm:$0xff] 0.0
          %330 = vst [vmem:[#allocation2 + $0x8] sm:$0xff] 0.0
          %331 = vst [vmem:[#allocation2 + $0x10] sm:$0xff] 0.0
          %332 = vst [vmem:[#allocation2 + $0x18] sm:$0xff] 0.0
          %333 = vst [vmem:[#allocation2 + $0x20] sm:$0xff] 0.0
          %334 = vst [vmem:[#allocation2 + $0x28] sm:$0xff] 0.0
          %335 = vst [vmem:[#allocation2 + $0x30] sm:$0xff] 0.0
          %336 = vst [vmem:[#allocation2 + $0x38] sm:$0xff] 0.0
          %337 = vst [vmem:[#allocation2 + $0x40] sm:$0xff] 0.0
          %338 = vst [vmem:[#allocation2 + $0x48] sm:$0xff] 0.0
          %339 = vst [vmem:[#allocation2 + $0x50] sm:$0xff] 0.0
          %340 = vst [vmem:[#allocation2 + $0x58] sm:$0xff] 0.0
          %341 = vst [vmem:[#allocation2 + $0x60] sm:$0xff] 0.0
          %342 = vst [vmem:[#allocation2 + $0x68] sm:$0xff] 0.0
          %343 = vst [vmem:[#allocation2 + $0x70] sm:$0xff] 0.0
          %344 = vst [vmem:[#allocation2 + $0x78] sm:$0xff] 0.0
        $region56: #{tpu_custom_call.1} parent=39 // pred_fallthru
          _
        %v345 = vld [vmem:[#allocation3] sm:$0xf]
        %v346 = vld [vmem:[#allocation3 + $0x4] sm:$0xf]
        %v347 = vld [vmem:[#allocation3 + $0x8] sm:$0xf]
        %v348 = vld [vmem:[#allocation3 + $0xc] sm:$0xf]
        %v349 = vld [vmem:[#allocation3 + $0x10] sm:$0xf]
        %v350 = vld [vmem:[#allocation3 + $0x14] sm:$0xf]
        %v351 = vld [vmem:[#allocation3 + $0x18] sm:$0xf]
        %v352 = vld [vmem:[#allocation3 + $0x1c] sm:$0xf]
        %v353 = vld [vmem:[#allocation3 + $0x20] sm:$0xf]
        %v354 = vld [vmem:[#allocation3 + $0x24] sm:$0xf]
        %v355 = vld [vmem:[#allocation3 + $0x28] sm:$0xf]
        %v356 = vld [vmem:[#allocation3 + $0x2c] sm:$0xf]
        %v357 = vld [vmem:[#allocation3 + $0x30] sm:$0xf]
        %v358 = vld [vmem:[#allocation3 + $0x34] sm:$0xf]
        %v359 = vld [vmem:[#allocation3 + $0x38] sm:$0xf]
        %v360 = vld [vmem:[#allocation3 + $0x3c] sm:$0xf]
        %v361 = vld [vmem:[%s279] sm:$0xf]
        %v362 = vld [vmem:[%s279 + $0x4] sm:$0xf]
        %v363 = vld [vmem:[%s279 + $0x8] sm:$0xf]
        %v364 = vld [vmem:[%s279 + $0xc] sm:$0xf]
        %v365 = vld [vmem:[%s279 + $0x10] sm:$0xf]
        %v366 = vld [vmem:[%s279 + $0x14] sm:$0xf]
        %v367 = vld [vmem:[%s279 + $0x18] sm:$0xf]
        %v368 = vld [vmem:[%s279 + $0x1c] sm:$0xf]
        %v369 = vld [vmem:[%s279 + $0x20] sm:$0xf]
        %v370 = vld [vmem:[%s279 + $0x24] sm:$0xf]
        %v371 = vld [vmem:[%s279 + $0x28] sm:$0xf]
        %v372 = vld [vmem:[%s279 + $0x2c] sm:$0xf]
        %v373 = vld [vmem:[%s279 + $0x30] sm:$0xf]
        %v374 = vld [vmem:[%s279 + $0x34] sm:$0xf]
        %v375 = vld [vmem:[%s279 + $0x38] sm:$0xf]
        %v376 = vld [vmem:[%s279 + $0x3c] sm:$0xf]
        %v377 = vld [vmem:[%s321] sm:$0x1]
        %v379 = vlaneseq
        %v380 = vshrl.u32 %v379, 7
        %v381 = vsub.s32 0, %v380
        %v382 = vrot.slane %v377, %v381
        %v400 = vunpack.c.l.b16 %v345
        %v401 = vunpack.c.l.b16 %v346
        %v402 = vunpack.c.l.b16 %v347
        %v403 = vunpack.c.l.b16 %v348
        %v404 = vunpack.c.l.b16 %v349
        %v405 = vunpack.c.l.b16 %v350
        %v406 = vunpack.c.l.b16 %v351
        %v407 = vunpack.c.l.b16 %v352
        %v408 = vunpack.c.l.b16 %v353
        %v409 = vunpack.c.l.b16 %v354
        %v410 = vunpack.c.l.b16 %v355
        %v411 = vunpack.c.l.b16 %v356
        %v412 = vunpack.c.l.b16 %v357
        %v413 = vunpack.c.l.b16 %v358
        %v414 = vunpack.c.l.b16 %v359
        %v415 = vunpack.c.l.b16 %v360
        %v416 = vpack.c.b16 %v401, %v400
        %v417 = vpack.c.b16 %v403, %v402
        %v418 = vpack.c.b16 %v405, %v404
        %v419 = vpack.c.b16 %v407, %v406
        %v420 = vpack.c.b16 %v409, %v408
        %v421 = vpack.c.b16 %v411, %v410
        %v422 = vpack.c.b16 %v413, %v412
        %v423 = vpack.c.b16 %v415, %v414
        %v448 = vunpack.c.l.b16 %v361
        %v449 = vunpack.c.l.b16 %v362
        %v450 = vunpack.c.l.b16 %v363
        %v451 = vunpack.c.l.b16 %v364
        %v452 = vunpack.c.l.b16 %v365
        %v453 = vunpack.c.l.b16 %v366
        %v454 = vunpack.c.l.b16 %v367
        %v455 = vunpack.c.l.b16 %v368
        %v456 = vunpack.c.l.b16 %v369
        %v457 = vunpack.c.l.b16 %v370
        %v458 = vunpack.c.l.b16 %v371
        %v459 = vunpack.c.l.b16 %v372
        %v460 = vunpack.c.l.b16 %v373
        %v461 = vunpack.c.l.b16 %v374
        %v462 = vunpack.c.l.b16 %v375
        %v463 = vunpack.c.l.b16 %v376
        %v464 = vpack.c.b16 %v449, %v448
        %v465 = vpack.c.b16 %v451, %v450
        %v466 = vpack.c.b16 %v453, %v452
        %v467 = vpack.c.b16 %v455, %v454
        %v468 = vpack.c.b16 %v457, %v456
        %v469 = vpack.c.b16 %v459, %v458
        %v470 = vpack.c.b16 %v461, %v460
        %v471 = vpack.c.b16 %v463, %v462
        %480 = vmatprep.subr.bf16.mxu0 0
        %481 = vmatpush1.bf16.msra.mxu0 %v464
        %482 = vmatprep.subr.bf16.mxu0 0
        %483 = vmatpush1.bf16.msra.mxu0 %v465
        %484 = vmatprep.subr.bf16.mxu0 0
        %485 = vmatpush1.bf16.msra.mxu0 %v466
        %486 = vmatprep.subr.bf16.mxu0 0
        %487 = vmatpush1.bf16.msra.mxu0 %v467
        %488 = vmatprep.subr.bf16.mxu0 0
        %489 = vmatpush1.bf16.msra.mxu0 %v468
        %490 = vmatprep.subr.bf16.mxu0 0
        %491 = vmatpush1.bf16.msra.mxu0 %v469
        %492 = vmatprep.subr.bf16.mxu0 0
        %493 = vmatpush1.bf16.msra.mxu0 %v470
        %494 = vmatprep.subr.bf16.mxu0 0
        %495 = vmatpush1.bf16.msra.mxu0 %v471
        %496 = vmatprep.subr.bf16.mxu0 0
        %497 = vmatpush1.bf16.msra.mxu0 0
        %498 = vmatprep.subr.bf16.mxu0 0
        %499 = vmatpush1.bf16.msra.mxu0 0
        %500 = vmatprep.subr.bf16.mxu0 0
        %501 = vmatpush1.bf16.msra.mxu0 0
        %502 = vmatprep.subr.bf16.mxu0 0
        %503 = vmatpush1.bf16.msra.mxu0 0
        %504 = vmatprep.subr.bf16.mxu0 0
        %505 = vmatpush1.bf16.msra.mxu0 0
        %506 = vmatprep.subr.bf16.mxu0 0
        %507 = vmatpush1.bf16.msra.mxu0 0
        %508 = vmatprep.subr.bf16.mxu0 0
        %509 = vmatpush1.bf16.msra.mxu0 0
        %510 = vmatprep.subr.bf16.mxu0 0
        %511 = vmatpush1.bf16.msra.mxu0 0
        %512 = vmatprep.mubr.bf16.mxu0 0
        %513 = vmatmul.mubr.bf16.gmra.mrb[0].mxu0 %v416
        %v514 = vpop.f32.mrb[0].mxu0
        %v515 = vadd.f32 %v382, %v514
        %v516 = vpop.f32.mrb[0].mxu0
        %v517 = vpop.f32.mrb[0].mxu0
        %v518 = vadd.f32 %v382, %v517
        %v519 = vpop.f32.mrb[0].mxu0
        %520 = vmatprep.mubr.bf16.mxu0 0
        %521 = vmatmul.mubr.bf16.gmra.mrb[0].mxu0 %v417
        %v522 = vpop.f32.mrb[0].mxu0
        %v523 = vadd.f32 %v382, %v522
        %v524 = vpop.f32.mrb[0].mxu0
        %v525 = vpop.f32.mrb[0].mxu0
        %v526 = vadd.f32 %v382, %v525
        %v527 = vpop.f32.mrb[0].mxu0
        %528 = vmatprep.mubr.bf16.mxu0 0
        %529 = vmatmul.mubr.bf16.gmra.mrb[0].mxu0 %v418
        %v530 = vpop.f32.mrb[0].mxu0
        %v531 = vadd.f32 %v382, %v530
        %v532 = vpop.f32.mrb[0].mxu0
        %v533 = vpop.f32.mrb[0].mxu0
        %v534 = vadd.f32 %v382, %v533
        %v535 = vpop.f32.mrb[0].mxu0
        %536 = vmatprep.mubr.bf16.mxu0 0
        %537 = vmatmul.mubr.bf16.gmra.mrb[0].mxu0 %v419
        %v538 = vpop.f32.mrb[0].mxu0
        %v539 = vadd.f32 %v382, %v538
        %v540 = vpop.f32.mrb[0].mxu0
        %v541 = vpop.f32.mrb[0].mxu0
        %v542 = vadd.f32 %v382, %v541
        %v543 = vpop.f32.mrb[0].mxu0
        %544 = vmatprep.mubr.bf16.mxu0 0
        %545 = vmatmul.mubr.bf16.gmra.mrb[0].mxu0 %v420
        %v546 = vpop.f32.mrb[0].mxu0
        %v547 = vadd.f32 %v382, %v546
        %v548 = vpop.f32.mrb[0].mxu0
        %v549 = vpop.f32.mrb[0].mxu0
        %v550 = vadd.f32 %v382, %v549
        %v551 = vpop.f32.mrb[0].mxu0
        %552 = vmatprep.mubr.bf16.mxu0 0
        %553 = vmatmul.mubr.bf16.gmra.mrb[0].mxu0 %v421
        %v554 = vpop.f32.mrb[0].mxu0
        %v555 = vadd.f32 %v382, %v554
        %v556 = vpop.f32.mrb[0].mxu0
        %v557 = vpop.f32.mrb[0].mxu0
        %v558 = vadd.f32 %v382, %v557
        %v559 = vpop.f32.mrb[0].mxu0
        %560 = vmatprep.mubr.bf16.mxu0 0
        %561 = vmatmul.mubr.bf16.gmra.mrb[0].mxu0 %v422
        %v562 = vpop.f32.mrb[0].mxu0
        %v563 = vadd.f32 %v382, %v562
        %v564 = vpop.f32.mrb[0].mxu0
        %v565 = vpop.f32.mrb[0].mxu0
        %v566 = vadd.f32 %v382, %v565
        %v567 = vpop.f32.mrb[0].mxu0
        %568 = vmatprep.mubr.bf16.mxu0 0
        %569 = vmatmul.mubr.bf16.gmra.mrb[0].mxu0 %v423
        %v570 = vpop.f32.mrb[0].mxu0
        %v571 = vadd.f32 %v382, %v570
        %v572 = vpop.f32.mrb[0].mxu0
        %v573 = vpop.f32.mrb[0].mxu0
        %v574 = vadd.f32 %v382, %v573
        %v575 = vpop.f32.mrb[0].mxu0
        %576 = vdwg.mxu0
        %v577 = vmul.f32 %v515, 0.5
        %v578 = vmul.f32 %v518, 0.5
        %v579 = vmul.f32 %v523, 0.5
        %v580 = vmul.f32 %v526, 0.5
        %v581 = vmul.f32 %v531, 0.5
        %v582 = vmul.f32 %v534, 0.5
        %v583 = vmul.f32 %v539, 0.5
        %v584 = vmul.f32 %v542, 0.5
        %v585 = vmul.f32 %v547, 0.5
        %v586 = vmul.f32 %v550, 0.5
        %v587 = vmul.f32 %v555, 0.5
        %v588 = vmul.f32 %v558, 0.5
        %v589 = vmul.f32 %v563, 0.5
        %v590 = vmul.f32 %v566, 0.5
        %v591 = vmul.f32 %v571, 0.5
        %v592 = vmul.f32 %v574, 0.5
        %v593 = vmul.f32 %v515, 0.70710677
        %v594 = vmul.f32 %v518, 0.70710677
        %v595 = vmul.f32 %v523, 0.70710677
        %v596 = vmul.f32 %v526, 0.70710677
        %v597 = vmul.f32 %v531, 0.70710677
        %v598 = vmul.f32 %v534, 0.70710677
        %v599 = vmul.f32 %v539, 0.70710677
        %v600 = vmul.f32 %v542, 0.70710677
        %v601 = vmul.f32 %v547, 0.70710677
        %v602 = vmul.f32 %v550, 0.70710677
        %v603 = vmul.f32 %v555, 0.70710677
        %v604 = vmul.f32 %v558, 0.70710677
        %v605 = vmul.f32 %v563, 0.70710677
        %v606 = vmul.f32 %v566, 0.70710677
        %v607 = vmul.f32 %v571, 0.70710677
        %v608 = vmul.f32 %v574, 0.70710677
        %v609 = verf.f32.pop %v593
        %v610 = verf.f32.pop %v594
        %v611 = verf.f32.pop %v595
        %v612 = verf.f32.pop %v596
        %v613 = verf.f32.pop %v597
        %v614 = verf.f32.pop %v598
        %v615 = verf.f32.pop %v599
        %v616 = verf.f32.pop %v600
        %v617 = verf.f32.pop %v601
        %v618 = verf.f32.pop %v602
        %v619 = verf.f32.pop %v603
        %v620 = verf.f32.pop %v604
        %v621 = verf.f32.pop %v605
        %v622 = verf.f32.pop %v606
        %v623 = verf.f32.pop %v607
        %v624 = verf.f32.pop %v608
        %v625 = vadd.f32 %v609, 1.0
        %v626 = vadd.f32 %v610, 1.0
        %v627 = vadd.f32 %v611, 1.0
        %v628 = vadd.f32 %v612, 1.0
        %v629 = vadd.f32 %v613, 1.0
        %v630 = vadd.f32 %v614, 1.0
        %v631 = vadd.f32 %v615, 1.0
        %v632 = vadd.f32 %v616, 1.0
        %v633 = vadd.f32 %v617, 1.0
        %v634 = vadd.f32 %v618, 1.0
        %v635 = vadd.f32 %v619, 1.0
        %v636 = vadd.f32 %v620, 1.0
        %v637 = vadd.f32 %v621, 1.0
        %v638 = vadd.f32 %v622, 1.0
        %v639 = vadd.f32 %v623, 1.0
        %v640 = vadd.f32 %v624, 1.0
        %v641 = vmul.f32 %v577, %v625
        %v642 = vmul.f32 %v578, %v626
        %v643 = vmul.f32 %v579, %v627
        %v644 = vmul.f32 %v580, %v628
        %v645 = vmul.f32 %v581, %v629
        %v646 = vmul.f32 %v582, %v630
        %v647 = vmul.f32 %v583, %v631
        %v648 = vmul.f32 %v584, %v632
        %v649 = vmul.f32 %v585, %v633
        %v650 = vmul.f32 %v586, %v634
        %v651 = vmul.f32 %v587, %v635
        %v652 = vmul.f32 %v588, %v636
        %v653 = vmul.f32 %v589, %v637
        %v654 = vmul.f32 %v590, %v638
        %v655 = vmul.f32 %v591, %v639
        %v656 = vmul.f32 %v592, %v640
        %v657 = vld [vmem:[#allocation2] sm:$0xff]
        %v658 = vld [vmem:[#allocation2 + $0x8] sm:$0xff]
        %v659 = vld [vmem:[#allocation2 + $0x10] sm:$0xff]
        %v660 = vld [vmem:[#allocation2 + $0x18] sm:$0xff]
        %v661 = vld [vmem:[#allocation2 + $0x20] sm:$0xff]
        %v662 = vld [vmem:[#allocation2 + $0x28] sm:$0xff]
        %v663 = vld [vmem:[#allocation2 + $0x30] sm:$0xff]
        %v664 = vld [vmem:[#allocation2 + $0x38] sm:$0xff]
        %v665 = vld [vmem:[#allocation2 + $0x40] sm:$0xff]
        %v666 = vld [vmem:[#allocation2 + $0x48] sm:$0xff]
        %v667 = vld [vmem:[#allocation2 + $0x50] sm:$0xff]
        %v668 = vld [vmem:[#allocation2 + $0x58] sm:$0xff]
        %v669 = vld [vmem:[#allocation2 + $0x60] sm:$0xff]
        %v670 = vld [vmem:[#allocation2 + $0x68] sm:$0xff]
        %v671 = vld [vmem:[#allocation2 + $0x70] sm:$0xff]
        %v672 = vld [vmem:[#allocation2 + $0x78] sm:$0xff]
        %v673 = vpack.c.bf16 %v642, %v641
        %v674 = vpack.c.bf16 %v644, %v643
        %v675 = vpack.c.bf16 %v646, %v645
        %v676 = vpack.c.bf16 %v648, %v647
        %v677 = vpack.c.bf16 %v650, %v649
        %v678 = vpack.c.bf16 %v652, %v651
        %v679 = vpack.c.bf16 %v654, %v653
        %v680 = vpack.c.bf16 %v656, %v655
        %v681 = vld [vmem:[%s288] sm:$0xf]
        %v682 = vld [vmem:[%s288 + $0x4] sm:$0xf]
        %v683 = vld [vmem:[%s288 + $0x8] sm:$0xf]
        %v684 = vld [vmem:[%s288 + $0xc] sm:$0xf]
        %v685 = vld [vmem:[%s288 + $0x10] sm:$0xf]
        %v686 = vld [vmem:[%s288 + $0x14] sm:$0xf]
        %v687 = vld [vmem:[%s288 + $0x18] sm:$0xf]
        %v688 = vld [vmem:[%s288 + $0x1c] sm:$0xf]
        %v689 = vld [vmem:[%s288 + $0x20] sm:$0xf]
        %v690 = vld [vmem:[%s288 + $0x24] sm:$0xf]
        %v691 = vld [vmem:[%s288 + $0x28] sm:$0xf]
        %v692 = vld [vmem:[%s288 + $0x2c] sm:$0xf]
        %v693 = vld [vmem:[%s288 + $0x30] sm:$0xf]
        %v694 = vld [vmem:[%s288 + $0x34] sm:$0xf]
        %v695 = vld [vmem:[%s288 + $0x38] sm:$0xf]
        %v696 = vld [vmem:[%s288 + $0x3c] sm:$0xf]
        %v713 = vunpack.c.l.b16 %v681
        %v714 = vunpack.c.l.b16 %v682
        %v715 = vunpack.c.l.b16 %v683
        %v716 = vunpack.c.l.b16 %v684
        %v717 = vunpack.c.l.b16 %v685
        %v718 = vunpack.c.l.b16 %v686
        %v719 = vunpack.c.l.b16 %v687
        %v720 = vunpack.c.l.b16 %v688
        %v721 = vunpack.c.l.b16 %v689
        %v722 = vunpack.c.l.b16 %v690
        %v723 = vunpack.c.l.b16 %v691
        %v724 = vunpack.c.l.b16 %v692
        %v725 = vunpack.c.l.b16 %v693
        %v726 = vunpack.c.l.b16 %v694
        %v727 = vunpack.c.l.b16 %v695
        %v728 = vunpack.c.l.b16 %v696
        %v729 = vpack.c.b16 %v714, %v713
        %v730 = vpack.c.b16 %v716, %v715
        %v731 = vpack.c.b16 %v718, %v717
        %v732 = vpack.c.b16 %v720, %v719
        %v733 = vpack.c.b16 %v722, %v721
        %v734 = vpack.c.b16 %v724, %v723
        %v735 = vpack.c.b16 %v726, %v725
        %v736 = vpack.c.b16 %v728, %v727
        %745 = vmatprep.subr.bf16.mxu0 0
        %746 = vmatpush1.bf16.msra.mxu0 %v729
        %747 = vmatprep.subr.bf16.mxu0 0
        %748 = vmatpush1.bf16.msra.mxu0 %v730
        %749 = vmatprep.subr.bf16.mxu0 0
        %750 = vmatpush1.bf16.msra.mxu0 %v731
        %751 = vmatprep.subr.bf16.mxu0 0
        %752 = vmatpush1.bf16.msra.mxu0 %v732
        %753 = vmatprep.subr.bf16.mxu0 0
        %754 = vmatpush1.bf16.msra.mxu0 %v733
        %755 = vmatprep.subr.bf16.mxu0 0
        %756 = vmatpush1.bf16.msra.mxu0 %v734
        %757 = vmatprep.subr.bf16.mxu0 0
        %758 = vmatpush1.bf16.msra.mxu0 %v735
        %759 = vmatprep.subr.bf16.mxu0 0
        %760 = vmatpush1.bf16.msra.mxu0 %v736
        %761 = vmatprep.subr.bf16.mxu0 0
        %762 = vmatpush1.bf16.msra.mxu0 0
        %763 = vmatprep.subr.bf16.mxu0 0
        %764 = vmatpush1.bf16.msra.mxu0 0
        %765 = vmatprep.subr.bf16.mxu0 0
        %766 = vmatpush1.bf16.msra.mxu0 0
        %767 = vmatprep.subr.bf16.mxu0 0
        %768 = vmatpush1.bf16.msra.mxu0 0
        %769 = vmatprep.subr.bf16.mxu0 0
        %770 = vmatpush1.bf16.msra.mxu0 0
        %771 = vmatprep.subr.bf16.mxu0 0
        %772 = vmatpush1.bf16.msra.mxu0 0
        %773 = vmatprep.subr.bf16.mxu0 0
        %774 = vmatpush1.bf16.msra.mxu0 0
        %775 = vmatprep.subr.bf16.mxu0 0
        %776 = vmatpush1.bf16.msra.mxu0 0
        %777 = vmatprep.mubr.bf16.mxu0 0
        %778 = vmatmul.mubr.bf16.gmra.mrb[0].mxu0 %v673
        %v779 = vpop.f32.mrb[0].mxu0
        %v780 = vadd.f32 0.0, %v779
        %v781 = vpop.f32.mrb[0].mxu0
        %v782 = vpop.f32.mrb[0].mxu0
        %v783 = vadd.f32 0.0, %v782
        %v784 = vpop.f32.mrb[0].mxu0
        %785 = vmatprep.mubr.bf16.mxu0 0
        %786 = vmatmul.mubr.bf16.gmra.mrb[0].mxu0 %v674
        %v787 = vpop.f32.mrb[0].mxu0
        %v788 = vadd.f32 0.0, %v787
        %v789 = vpop.f32.mrb[0].mxu0
        %v790 = vpop.f32.mrb[0].mxu0
        %v791 = vadd.f32 0.0, %v790
        %v792 = vpop.f32.mrb[0].mxu0
        %793 = vmatprep.mubr.bf16.mxu0 0
        %794 = vmatmul.mubr.bf16.gmra.mrb[0].mxu0 %v675
        %v795 = vpop.f32.mrb[0].mxu0
        %v796 = vadd.f32 0.0, %v795
        %v797 = vpop.f32.mrb[0].mxu0
        %v798 = vpop.f32.mrb[0].mxu0
        %v799 = vadd.f32 0.0, %v798
        %v800 = vpop.f32.mrb[0].mxu0
        %801 = vmatprep.mubr.bf16.mxu0 0
        %802 = vmatmul.mubr.bf16.gmra.mrb[0].mxu0 %v676
        %v803 = vpop.f32.mrb[0].mxu0
        %v804 = vadd.f32 0.0, %v803
        %v805 = vpop.f32.mrb[0].mxu0
        %v806 = vpop.f32.mrb[0].mxu0
        %v807 = vadd.f32 0.0, %v806
        %v808 = vpop.f32.mrb[0].mxu0
        %809 = vmatprep.mubr.bf16.mxu0 0
        %810 = vmatmul.mubr.bf16.gmra.mrb[0].mxu0 %v677
        %v811 = vpop.f32.mrb[0].mxu0
        %v812 = vadd.f32 0.0, %v811
        %v813 = vpop.f32.mrb[0].mxu0
        %v814 = vpop.f32.mrb[0].mxu0
        %v815 = vadd.f32 0.0, %v814
        %v816 = vpop.f32.mrb[0].mxu0
        %817 = vmatprep.mubr.bf16.mxu0 0
        %818 = vmatmul.mubr.bf16.gmra.mrb[0].mxu0 %v678
        %v819 = vpop.f32.mrb[0].mxu0
        %v820 = vadd.f32 0.0, %v819
        %v821 = vpop.f32.mrb[0].mxu0
        %v822 = vpop.f32.mrb[0].mxu0
        %v823 = vadd.f32 0.0, %v822
        %v824 = vpop.f32.mrb[0].mxu0
        %825 = vmatprep.mubr.bf16.mxu0 0
        %826 = vmatmul.mubr.bf16.gmra.mrb[0].mxu0 %v679
        %v827 = vpop.f32.mrb[0].mxu0
        %v828 = vadd.f32 0.0, %v827
        %v829 = vpop.f32.mrb[0].mxu0
        %v830 = vpop.f32.mrb[0].mxu0
        %v831 = vadd.f32 0.0, %v830
        %v832 = vpop.f32.mrb[0].mxu0
        %833 = vmatprep.mubr.bf16.mxu0 0
        %834 = vmatmul.mubr.bf16.gmra.mrb[0].mxu0 %v680
        %v835 = vpop.f32.mrb[0].mxu0
        %v836 = vadd.f32 0.0, %v835
        %v837 = vpop.f32.mrb[0].mxu0
        %v838 = vpop.f32.mrb[0].mxu0
        %v839 = vadd.f32 0.0, %v838
        %v840 = vpop.f32.mrb[0].mxu0
        %841 = vdwg.mxu0
        %v842 = vadd.f32 %v657, %v780
        %v843 = vadd.f32 %v658, %v783
        %v844 = vadd.f32 %v659, %v788
        %v845 = vadd.f32 %v660, %v791
        %v846 = vadd.f32 %v661, %v796
        %v847 = vadd.f32 %v662, %v799
        %v848 = vadd.f32 %v663, %v804
        %v849 = vadd.f32 %v664, %v807
        %v850 = vadd.f32 %v665, %v812
        %v851 = vadd.f32 %v666, %v815
        %v852 = vadd.f32 %v667, %v820
        %v853 = vadd.f32 %v668, %v823
        %v854 = vadd.f32 %v669, %v828
        %v855 = vadd.f32 %v670, %v831
        %v856 = vadd.f32 %v671, %v836
        %v857 = vadd.f32 %v672, %v839
        %858 = vst [vmem:[#allocation2] sm:$0xff] %v842
        %859 = vst [vmem:[#allocation2 + $0x8] sm:$0xff] %v843
        %860 = vst [vmem:[#allocation2 + $0x10] sm:$0xff] %v844
        %861 = vst [vmem:[#allocation2 + $0x18] sm:$0xff] %v845
        %862 = vst [vmem:[#allocation2 + $0x20] sm:$0xff] %v846
        %863 = vst [vmem:[#allocation2 + $0x28] sm:$0xff] %v847
        %864 = vst [vmem:[#allocation2 + $0x30] sm:$0xff] %v848
        %865 = vst [vmem:[#allocation2 + $0x38] sm:$0xff] %v849
        %866 = vst [vmem:[#allocation2 + $0x40] sm:$0xff] %v850
        %867 = vst [vmem:[#allocation2 + $0x48] sm:$0xff] %v851
        %868 = vst [vmem:[#allocation2 + $0x50] sm:$0xff] %v852
        %869 = vst [vmem:[#allocation2 + $0x58] sm:$0xff] %v853
        %870 = vst [vmem:[#allocation2 + $0x60] sm:$0xff] %v854
        %871 = vst [vmem:[#allocation2 + $0x68] sm:$0xff] %v855
        %872 = vst [vmem:[#allocation2 + $0x70] sm:$0xff] %v856
        %873 = vst [vmem:[#allocation2 + $0x78] sm:$0xff] %v857
        %p874 = scmp.eq.s32.totalorder %s26, 3
        // Predicated region
        $region57: #{tpu_custom_call.1} parent=39 // pred_check
          %p875 = pneg %p874
        $region58: #{tpu_custom_call.1} parent=39 // pred_check_branch
          %877 = sbr.rel (%p875) target = $region60
        $region59: #{tpu_custom_call.1} parent=39 // pred_region
          %v878 = vld [vmem:[#allocation2] sm:$0xff]
          %v879 = vld [vmem:[#allocation2 + $0x8] sm:$0xff]
          %v880 = vld [vmem:[#allocation2 + $0x10] sm:$0xff]
          %v881 = vld [vmem:[#allocation2 + $0x18] sm:$0xff]
          %v882 = vld [vmem:[#allocation2 + $0x20] sm:$0xff]
          %v883 = vld [vmem:[#allocation2 + $0x28] sm:$0xff]
          %v884 = vld [vmem:[#allocation2 + $0x30] sm:$0xff]
          %v885 = vld [vmem:[#allocation2 + $0x38] sm:$0xff]
          %v886 = vld [vmem:[#allocation2 + $0x40] sm:$0xff]
          %v887 = vld [vmem:[#allocation2 + $0x48] sm:$0xff]
          %v888 = vld [vmem:[#allocation2 + $0x50] sm:$0xff]
          %v889 = vld [vmem:[#allocation2 + $0x58] sm:$0xff]
          %v890 = vld [vmem:[#allocation2 + $0x60] sm:$0xff]
          %v891 = vld [vmem:[#allocation2 + $0x68] sm:$0xff]
          %v892 = vld [vmem:[#allocation2 + $0x70] sm:$0xff]
          %v893 = vld [vmem:[#allocation2 + $0x78] sm:$0xff]
          %v894 = vld [vmem:[%s4] sm:$0x1]
          %v896 = vlaneseq
          %v897 = vshrl.u32 %v896, 7
          %v898 = vsub.s32 0, %v897
          %v899 = vrot.slane %v894, %v898
          %v901 = vadd.f32 %v878, %v899
          %v902 = vadd.f32 %v879, %v899
          %v903 = vadd.f32 %v880, %v899
          %v904 = vadd.f32 %v881, %v899
          %v905 = vadd.f32 %v882, %v899
          %v906 = vadd.f32 %v883, %v899
          %v907 = vadd.f32 %v884, %v899
          %v908 = vadd.f32 %v885, %v899
          %v909 = vadd.f32 %v886, %v899
          %v910 = vadd.f32 %v887, %v899
          %v911 = vadd.f32 %v888, %v899
          %v912 = vadd.f32 %v889, %v899
          %v913 = vadd.f32 %v890, %v899
          %v914 = vadd.f32 %v891, %v899
          %v915 = vadd.f32 %v892, %v899
          %v916 = vadd.f32 %v893, %v899
          %917 = vst [vmem:[#allocation9] sm:$0xff] %v901
          %918 = vst [vmem:[#allocation9 + $0x8] sm:$0xff] %v902
          %919 = vst [vmem:[#allocation9 + $0x10] sm:$0xff] %v903
          %920 = vst [vmem:[#allocation9 + $0x18] sm:$0xff] %v904
          %921 = vst [vmem:[#allocation9 + $0x20] sm:$0xff] %v905
          %922 = vst [vmem:[#allocation9 + $0x28] sm:$0xff] %v906
          %923 = vst [vmem:[#allocation9 + $0x30] sm:$0xff] %v907
          %924 = vst [vmem:[#allocation9 + $0x38] sm:$0xff] %v908
          %925 = vst [vmem:[#allocation9 + $0x40] sm:$0xff] %v909
          %926 = vst [vmem:[#allocation9 + $0x48] sm:$0xff] %v910
          %927 = vst [vmem:[#allocation9 + $0x50] sm:$0xff] %v911
          %928 = vst [vmem:[#allocation9 + $0x58] sm:$0xff] %v912
          %929 = vst [vmem:[#allocation9 + $0x60] sm:$0xff] %v913
          %930 = vst [vmem:[#allocation9 + $0x68] sm:$0xff] %v914
          %931 = vst [vmem:[#allocation9 + $0x70] sm:$0xff] %v915
          %932 = vst [vmem:[#allocation9 + $0x78] sm:$0xff] %v916
        $region60: #{tpu_custom_call.1} parent=39 // pred_fallthru
          _
        // Predicated region
        $region61: #{tpu_custom_call.1} parent=39 // pred_check
          %p933 = pneg %p176
        $region62: #{tpu_custom_call.1} parent=39 // pred_check_branch
          %935 = sbr.rel (%p933) target = $region64
        $region63: #{tpu_custom_call.1} parent=39 // pred_region
          %s936 = smul.u32 16, %s25
          %s938 = ssub.s32 2048, 2048
          %939 = vsyncadd [#allocation5], %s938
          %s940 = smul.addr %s936, 128
          %s941 = scalar_lea.hbm %s5, %s940
          %s942 = sshll.u32 [#allocation9], 4
          %s943 = int_to_ptr.vmem [resolvable:$true] %s942
          %948 = dma.vmem_to_hbm [thread:$0]  %s943, 2048, %s941, [#allocation5], 128, 128, 8
        $region64: #{tpu_custom_call.1} parent=39 // pred_fallthru
          _
        // Predicated region
        $region65: #{tpu_custom_call.1} parent=39 // pred_check
          %p949 = pneg %p176
        $region66: #{tpu_custom_call.1} parent=39 // pred_check_branch
          %951 = sbr.rel (%p949) target = $region68
        $region67: #{tpu_custom_call.1} parent=39 // pred_region
          %952 = dma.done [#allocation5], 2048
        $region68: #{tpu_custom_call.1} parent=39 // pred_fallthru
          _
      $region40: #{tpu_custom_call.1} parent=5 // pred_fallthru
        _
      %p953 = scmp.le.s32.totalorder 2, %s16
      // Predicated region
      $region69: #{tpu_custom_call.1} parent=5 // pred_check
        %p954 = pneg %p953
      $region70: #{tpu_custom_call.1} parent=5 // pred_check_branch
        %956 = sbr.rel (%p954) target = $region72
      $region71: #{tpu_custom_call.1} parent=5 // pred_region
        %s957 = ssub.s32 %s16, 2
      $region72: #{tpu_custom_call.1} parent=5 // pred_fallthru
        _
    $region6: #{tpu_custom_call.1} parent=1 // loop_footer
      %s20 = sadd.s32 1, %s16
    $region7: #{tpu_custom_call.1} parent=1 // loop_footer_branch
      %15 = sbr.rel target = $region3
    $region8: #{tpu_custom_call.1} parent=1 // loop_exit
      _
    %958 = vsyncpa [#allocation4], 1
    %s959 = scalar_lea.sflag [#allocation4], 1
    %960 = vsyncpa %s959, 1
    %961 = vsyncpa [#allocation7], 1
    %s962 = scalar_lea.sflag [#allocation7], 1
    %963 = vsyncpa %s962, 1
    %964 = vsyncpa [#allocation5], 1
    %s965 = scalar_lea.sflag [#allocation5], 1
    %966 = vsyncpa %s965, 1

</llo_original>
